<compile_context>
chip_gen: v5e
topology: v5e:2x2
jax: 0.10.0
libtpu: 0.0.40
codegen_flags: <defaults>
</compile_context>

<pallas_src>
import jax
import jax.numpy as jnp
from jax.experimental import pallas as pl
from jax.experimental.pallas import tpu as pltpu

_LANE = 128
_SMALL_INPUT_BYTES = 1 << 20   # below this, no Pallas dispatch (XLA fuses the affine)
_VMEM_LIMIT_BYTES = 32 << 20


def _sublane_for_dtype(dtype) -> int:
    """Minimum second-minor tile for the dtype (f32: 8, bf16/f16: 16, int8/fp8: 32)."""
    itemsize = jnp.dtype(dtype).itemsize
    return {4: 8, 2: 16, 1: 32}.get(itemsize, 8)


def _tile_bytes_for_device() -> int:
    """Per-buffer tile budget, gated by TPU generation."""
    try:
        kind = jax.devices()[0].device_kind.lower()
    except Exception:
        return 2 << 20
    if "v5" in kind:
        return 2 << 20          # v5e scoped-VMEM default is only 16 MiB
    return 4 << 20              # v6e / v7x: larger tiles amortize ~0.35us/step overhead


def _row_axis_semantics():
    """CORE_PARALLEL on v7x (2 TCs), plain 'parallel' elsewhere."""
    try:
        kind = jax.devices()[0].device_kind.lower()
    except Exception:
        kind = ""
    if "v7" in kind:
        return (pltpu.CORE_PARALLEL,)
    return ("parallel",)


def _affine_kernel(ab_ref, x_ref, o_ref):
    """out = a * x + b  (a, b read from SMEM; compute in f32, cast back)."""
    a = ab_ref[0]
    b = ab_ref[1]
    o_ref[...] = (x_ref[...] * a + b).astype(o_ref.dtype)


def scale_normalize_zero_centered(scale: jax.Array,
                                  scale_mapping_min: float,
                                  scale_mapping_max: float,
                                  *, force_pallas: bool = False) -> jax.Array:
    """JAX/Pallas equivalent of ScaleNormalizeZeroCentered.forward."""
    orig_shape = scale.shape
    dtype = scale.dtype
    n = scale.size

    # Affine coefficients in f32 on-device: a*x + b == 2*(x-min)/(max-min) - 1.
    # jnp division -> min == max gives inf/nan (matches PyTorch), not a Python error.
    mn = jnp.asarray(scale_mapping_min, jnp.float32)
    mx = jnp.asarray(scale_mapping_max, jnp.float32)
    inv = 1.0 / (mx - mn)
    a = 2.0 * inv
    b = -2.0 * mn * inv - 1.0

    if n == 0:
        return scale

    itemsize = jnp.dtype(dtype).itemsize
    if not force_pallas and n * itemsize < _SMALL_INPUT_BYTES:
        # Tiny conditioning vectors: dispatch + pad overhead dwarfs the 2-op compute.
        return (scale.astype(jnp.float32) * a + b).astype(dtype)

    ab = jnp.stack([a, b])                      # (2,) f32, lives in SMEM in-kernel

    sub = _sublane_for_dtype(dtype)
    align = sub * _LANE

    flat = scale.reshape(-1)
    padded = (n % align) != 0
    if padded:
        padded_n = pl.cdiv(n, align) * align    # pad by at most sub*128 - 1 elements
        flat = jnp.pad(flat, (0, padded_n - n))
    x2d = flat.reshape(-1, _LANE)               # lane-dense (rows, 128) slab
    rows = x2d.shape[0]                         # multiple of `sub` by construction

    tile_bytes = _tile_bytes_for_device()
    tile_r_cap = max(sub, ((tile_bytes // (_LANE * itemsize)) // sub) * sub)
    tile_r = min(tile_r_cap, rows)
    grid = (pl.cdiv(rows, tile_r),)             # ragged last block handled by Pallas

    def _call(dim_sem):
        return pl.pallas_call(
            _affine_kernel,
            out_shape=jax.ShapeDtypeStruct(x2d.shape, dtype),
            grid=grid,
            in_specs=[
                pl.BlockSpec(memory_space=pltpu.MemorySpace.SMEM),     # (2,) coeffs
                pl.BlockSpec((tile_r, _LANE), lambda i: (i, 0)),
            ],
            out_specs=pl.BlockSpec((tile_r, _LANE), lambda i: (i, 0)),
            compiler_params=pltpu.CompilerParams(
                dimension_semantics=dim_sem,
                vmem_limit_bytes=_VMEM_LIMIT_BYTES),
        )(ab, x2d)

    dim_sem = _row_axis_semantics()
    try:
        out_2d = _call(dim_sem)
    except Exception:
        if dim_sem == ("parallel",):
            raise
        out_2d = _call(("parallel",))           # safe fallback if CORE_PARALLEL rejected

    if padded:
        return out_2d.reshape(-1)[:n].reshape(orig_shape)
    return out_2d.reshape(orig_shape)


if __name__ == "__main__":
    # Deterministic "parameters" (from __init__): the scale-mapping range.
    scale_mapping_min = 0.0
    scale_mapping_max = 6.0

    def ref_fn(x):
        return 2.0 * ((x - scale_mapping_min)
                      / (scale_mapping_max - scale_mapping_min)) - 1.0

    key = jax.random.PRNGKey(0)
    scale = jax.random.uniform(key, (2, 8), dtype=jnp.float32,
                               minval=scale_mapping_min, maxval=scale_mapping_max)

    # 1) Small input: fast path (no Pallas dispatch, XLA fuses the affine).
    out_small = jax.block_until_ready(
        scale_normalize_zero_centered(scale, scale_mapping_min, scale_mapping_max))
    assert out_small.shape == scale.shape and out_small.dtype == scale.dtype
    assert jnp.allclose(out_small, ref_fn(scale), atol=1e-6, rtol=1e-6)

    # 2) Same input forced through the Pallas kernel (exercises pad + masked tail tile).
    out_pallas = jax.block_until_ready(
        scale_normalize_zero_centered(scale, scale_mapping_min, scale_mapping_max,
                                      force_pallas=True))
    assert out_pallas.shape == scale.shape and out_pallas.dtype == scale.dtype
    assert jnp.allclose(out_pallas, ref_fn(scale), atol=1e-6, rtol=1e-6)

    # 3) Typical [batch, 1] conditioning-vector shape through the kernel.
    scale_b1 = jax.random.uniform(jax.random.PRNGKey(0), (4, 1), dtype=jnp.float32,
                                  minval=scale_mapping_min, maxval=scale_mapping_max)
    out_b1 = jax.block_until_ready(
        scale_normalize_zero_centered(scale_b1, scale_mapping_min, scale_mapping_max,
                                      force_pallas=True))
    assert out_b1.shape == scale_b1.shape
    assert jnp.allclose(out_b1, ref_fn(scale_b1), atol=1e-6, rtol=1e-6)

    # 4) Aligned (no-pad) path + bf16 dtype round-trip.
    scale_bf16 = jax.random.uniform(jax.random.PRNGKey(1), (16, 128), dtype=jnp.float32,
                                    minval=scale_mapping_min, maxval=scale_mapping_max
                                    ).astype(jnp.bfloat16)
    out_bf16 = jax.block_until_ready(
        scale_normalize_zero_centered(scale_bf16, scale_mapping_min, scale_mapping_max,
                                      force_pallas=True))
    assert out_bf16.shape == scale_bf16.shape and out_bf16.dtype == jnp.bfloat16
    assert jnp.allclose(out_bf16.astype(jnp.float32),
                        ref_fn(scale_bf16.astype(jnp.float32)), atol=2e-2, rtol=2e-2)

    print("KERNEL_OK")
</pallas_src>

<mosaic_0001>
module attributes {stable_mosaic.version = 11 : i64} {
  func.func @_affine_kernel(%arg0: i32, %arg1: memref<2xf32, #tpu.memory_space<smem>>, %arg2: memref<8x128xf32, #tpu.memory_space<vmem>>, %arg3: memref<8x128xf32, #tpu.memory_space<vmem>>) attributes {dimension_semantics = [#tpu.dimension_semantics<parallel>], iteration_bounds = array<i64: 1>, scalar_prefetch = 0 : i64, scratch_operands = 0 : i64, tpu.core_type = #tpu.core_type<tc>, window_params = [{transform_indices = @transform_0, window_bounds = array<i64: 2>}, {transform_indices = @transform_1, window_bounds = array<i64: 8, 128>}, {transform_indices = @transform_2, window_bounds = array<i64: 8, 128>}]} {
    %c0 = arith.constant 0 : index
    %0 = memref.load %arg1[%c0] : memref<2xf32, #tpu.memory_space<smem>>
    %c1 = arith.constant 1 : index
    %1 = memref.load %arg1[%c1] : memref<2xf32, #tpu.memory_space<smem>>
    %c0_0 = arith.constant 0 : index
    %c0_1 = arith.constant 0 : index
    %2 = vector.load %arg2[%c0_0, %c0_1] : memref<8x128xf32, #tpu.memory_space<vmem>>, vector<8x128xf32>
    %3 = vector.broadcast %0 : f32 to vector<8x128xf32>
    %4 = arith.mulf %2, %3 : vector<8x128xf32>
    %5 = vector.broadcast %1 : f32 to vector<8x128xf32>
    %6 = arith.addf %4, %5 : vector<8x128xf32>
    %c0_2 = arith.constant 0 : index
    %c0_3 = arith.constant 0 : index
    %7 = vector.load %arg3[%c0_2, %c0_3] : memref<8x128xf32, #tpu.memory_space<vmem>>, vector<8x128xf32>
    tpu.vector_store %arg3[%c0_2, %c0_3], %6 {strides = array<i32>} : memref<8x128xf32, #tpu.memory_space<vmem>>, vector<8x128xf32>,
    return
  }
  func.func @transform_0(%arg0: i32) -> i32 {
    %c0_i32 = arith.constant 0 : i32
    %c0_i32_0 = arith.constant 0 : i32
    return %c0_i32 : i32
  }
  func.func @transform_1(%arg0: i32) -> (i32, i32) {
    %c0_i32 = arith.constant 0 : i32
    %c0_i32_0 = arith.constant 0 : i32
    return %arg0, %c0_i32 : i32, i32
  }
  func.func @transform_2(%arg0: i32) -> (i32, i32) {
    %c0_i32 = arith.constant 0 : i32
    %c0_i32_0 = arith.constant 0 : i32
    return %arg0, %c0_i32 : i32, i32
  }
}

</mosaic_0001>

<llo_original>
// kernel: tpu_custom_call.1
$region0: #{tpu_custom_call.1}
  #allocation0 [shape = 'u32[]', space=smem, size = 0x4, offset = 0x4, fixed_abs, tag = 'smem constant byte address 0x4 - core index']
  #allocation1 [shape = 'u32[72,128]{1,0:T(1,128)}', space=vmem, size = 0x9000, scoped, tag = 'internal scratch']
  %s0 = inlined_call_operand.hbm [shape: f32[2], index: 0, kind: input, shape index: {}]
  %s1 = inlined_call_operand.hbm [shape: f32[8,128], index: 1, kind: input, shape index: {}]
  %s2 = inlined_call_operand.hbm [shape: f32[8,128], index: 2, kind: output, shape index: {}]
  %s3 = sld [smem:[#allocation0]]
  $region26: #{tpu_custom_call.1} parent=0
    _
  %s5 = ssub.s32 1, %s3
  %s6 = scalar_select 0, %s5, %s3
  $region1: #{tpu_custom_call.1} parent=0
    #allocation2 [shape = 'u8[512]{0}', space=smem, size = 0x200, scoped, tag = 'input window, operand 0, single buffered']
    #allocation3 [shape = 's32[1]{0}', space=sflag, size = 0x4, scoped, tag = 'scoped memory for tpu_custom_call.1']
    #allocation4 [shape = 's32[1]{0}', space=sflag, size = 0x4, scoped, tag = 'scoped memory for tpu_custom_call.1']
    #allocation5 [shape = 's32[1]{0}', space=sflag, size = 0x4, scoped, tag = 'scoped memory for tpu_custom_call.1']
    #allocation6 [shape = 'u8[4096]{0}', space=vmem, size = 0x1000, scoped, tag = 'input window, operand 1, single buffered']
    #allocation7 [shape = 'u8[4096]{0}', space=vmem, size = 0x1000, scoped, tag = 'output window, operand 0, single buffered']
    %7 = vsyncpa [#allocation5], 0
    %8 = vsyncpa [#allocation3], 0
    %9 = vsyncpa [#allocation4], 0
    // Predicated region
    $region2: #{tpu_custom_call.1} parent=1 // pred_check
      _
    $region3: #{tpu_custom_call.1} parent=1 // pred_check_branch
      %11 = sbr.rel (0) target = $region5
    $region4: #{tpu_custom_call.1} parent=1 // pred_region
      %13 = vsyncadd [#allocation5], 0
      %s15 = sshll.u32 %s0, 4
      %s16 = int_to_ptr.hbm [resolvable:$true] %s15
      %18 = dma.hbm_to_smem %s16, 16, [#allocation2], [#allocation5]
    $region5: #{tpu_custom_call.1} parent=1 // pred_fallthru
      _
    // Predicated region
    $region6: #{tpu_custom_call.1} parent=1 // pred_check
      _
    $region7: #{tpu_custom_call.1} parent=1 // pred_check_branch
      %20 = sbr.rel (0) target = $region9
    $region8: #{tpu_custom_call.1} parent=1 // pred_region
      %22 = vsyncadd [#allocation3], 0
      %s24 = sshll.u32 %s1, 4
      %s25 = int_to_ptr.hbm [resolvable:$true] %s24
      %s26 = sshll.u32 [#allocation6], 4
      %s27 = int_to_ptr.vmem [resolvable:$true] %s26
      %29 = dma.hbm_to_vmem [thread:$0]  %s25, 128, %s27, [#allocation3]
    $region9: #{tpu_custom_call.1} parent=1 // pred_fallthru
      _
    // Predicated region
    $region10: #{tpu_custom_call.1} parent=1 // pred_check
      _
    $region11: #{tpu_custom_call.1} parent=1 // pred_check_branch
      %31 = sbr.rel (0) target = $region13
    $region12: #{tpu_custom_call.1} parent=1 // pred_region
      %33 = dma.done [#allocation5], 16
    $region13: #{tpu_custom_call.1} parent=1 // pred_fallthru
      _
    // Predicated region
    $region14: #{tpu_custom_call.1} parent=1 // pred_check
      _
    $region15: #{tpu_custom_call.1} parent=1 // pred_check_branch
      %35 = sbr.rel (0) target = $region17
    $region16: #{tpu_custom_call.1} parent=1 // pred_region
      %37 = dma.done [#allocation3], 128
    $region17: #{tpu_custom_call.1} parent=1 // pred_fallthru
      _
    %38 = sfence
    %s39 = sld [smem:[#allocation2]]
    %s40 = sld [smem:[#allocation2 + $0x1]]
    %v41 = vld [vmem:[#allocation6] sm:$0xff]
    %v42 = vstv %s39
    %v43 = vmul.f32 %v41, %v42
    %v44 = vstv %s40
    %v45 = vadd.f32 %v43, %v44
    %46 = vst [vmem:[#allocation7] sm:$0xff] %v45
    // Predicated region
    $region18: #{tpu_custom_call.1} parent=1 // pred_check
      _
    $region19: #{tpu_custom_call.1} parent=1 // pred_check_branch
      %48 = sbr.rel (0) target = $region21
    $region20: #{tpu_custom_call.1} parent=1 // pred_region
      %50 = vsyncadd [#allocation4], 0
      %s52 = sshll.u32 [#allocation7], 4
      %s53 = int_to_ptr.vmem [resolvable:$true] %s52
      %s54 = sshll.u32 %s2, 4
      %s55 = int_to_ptr.hbm [resolvable:$true] %s54
      %57 = dma.vmem_to_hbm [thread:$0]  %s53, 128, %s55, [#allocation4]
    $region21: #{tpu_custom_call.1} parent=1 // pred_fallthru
      _
    // Predicated region
    $region22: #{tpu_custom_call.1} parent=1 // pred_check
      _
    $region23: #{tpu_custom_call.1} parent=1 // pred_check_branch
      %59 = sbr.rel (0) target = $region25
    $region24: #{tpu_custom_call.1} parent=1 // pred_region
      %61 = dma.done [#allocation4], 128
    $region25: #{tpu_custom_call.1} parent=1 // pred_fallthru
      _
    %62 = vsyncpa [#allocation3], 1
    %63 = vsyncpa [#allocation4], 1
    %64 = vsyncpa [#allocation5], 1

</llo_original>
